<compile_context>
chip_gen: v6e
topology: v6e:2x2x1
jax: 0.10.0
libtpu: 0.0.40
codegen_flags: <defaults>
</compile_context>

<pallas_src>
import functools

import jax
import jax.numpy as jnp
from jax.experimental import pallas as pl
from jax.experimental.pallas import tpu as pltpu


HIDDEN = 128   # fixed by the module definition


def _round_up(n, m):
    return ((n + m - 1) // m) * m


def _mlp_kernel(x_ref, w1_ref, b1_ref, w2_ref, b2_ref, w3_ref, b3_ref, o_ref):
    """Fused Linear->ReLU->Linear->ReLU->Linear for one batch tile.

    Matmul operands are bf16, accumulation is f32 on the MXU; bias adds and
    ReLU run in f32 on the VPU.
    """
    x = x_ref[...].astype(jnp.bfloat16)

    # Layer 1: (bb, d_in) @ (d_in, 128) + (1, 128), ReLU
    h1 = jnp.dot(x, w1_ref[...], preferred_element_type=jnp.float32)
    h1 = jnp.maximum(h1 + b1_ref[...], 0.0)

    # Layer 2: (bb, 128) @ (128, 128) + (1, 128), ReLU
    h2 = jnp.dot(h1.astype(jnp.bfloat16), w2_ref[...],
                 preferred_element_type=jnp.float32)
    h2 = jnp.maximum(h2 + b2_ref[...], 0.0)

    # Layer 3: (bb, 128) @ (128, d_out) + (1, d_out)
    out = jnp.dot(h2.astype(jnp.bfloat16), w3_ref[...],
                  preferred_element_type=jnp.float32)
    o_ref[...] = (out + b3_ref[...]).astype(o_ref.dtype)


def prepare_params(params):
    """One-time parameter prep: cast matmul weights to bf16 (biases stay f32).

    Call once after init / after each optimizer step; the jitted forward then
    does no per-call weight casting or padding.
    """
    w1, b1, w2, b2, w3, b3 = params
    return (w1.astype(jnp.bfloat16), b1.astype(jnp.float32),
            w2.astype(jnp.bfloat16), b2.astype(jnp.float32),
            w3.astype(jnp.bfloat16), b3.astype(jnp.float32))


def _tile_batch(B, block_b):
    """Derive (num_steps, rows_per_step, padded_batch) from the grid, not the
    other way around, so padding is at most 7 rows."""
    n = pl.cdiv(B, block_b)                 # grid steps
    bb = _round_up(pl.cdiv(B, n), 8)        # 8-aligned rows per step
    return n, bb, n * bb


@functools.partial(jax.jit, static_argnames=("block_b",))
def neural_network_forward(x, prepped_params, block_b=512):
    """Runs the 3-layer MLP. x: (B, input_dim) -> (B, output_dim) float32.

    x may be float32 or bf16 (it is cast to bf16 inside the kernel); do not
    add a separate wrapper-side cast pass.
    """
    w1, b1, w2, b2, w3, b3 = prepped_params
    B, d_in = x.shape
    d_out = w3.shape[1]

    n, bb, B_pad = _tile_batch(B, block_b)
    if B_pad != B:
        x = jnp.pad(x, ((0, B_pad - B), (0, 0)))

    # Whole weight matrices / biases stay VMEM-resident across grid steps.
    full = lambda shape: pl.BlockSpec(shape, lambda i: (0, 0))

    out = pl.pallas_call(
        _mlp_kernel,
        out_shape=jax.ShapeDtypeStruct((B_pad, d_out), jnp.float32),
        grid=(n,),
        in_specs=[
            pl.BlockSpec((bb, d_in), lambda i: (i, 0)),  # x batch tile
            full((d_in, HIDDEN)),                        # W1 (bf16)
            full((1, HIDDEN)),                           # b1 (f32)
            full((HIDDEN, HIDDEN)),                      # W2 (bf16)
            full((1, HIDDEN)),                           # b2 (f32)
            full((HIDDEN, d_out)),                       # W3 (bf16, full last dim)
            full((1, d_out)),                            # b3 (f32, full last dim)
        ],
        out_specs=pl.BlockSpec((bb, d_out), lambda i: (i, 0)),
        compiler_params=pltpu.CompilerParams(
            dimension_semantics=("parallel",),  # splits batch tiles across TCs on v7x
        ),
    )(x, w1, b1, w2, b2, w3, b3)

    if B_pad != B:
        out = out[:B]
    return out


def init_params(key, input_dim, output_dim):
    """Deterministic init mimicking PyTorch nn.Linear defaults:
    U(-1/sqrt(fan_in), 1/sqrt(fan_in)) for both weight and bias.
    Weights are stored transposed vs. torch, i.e. (in, out), so the kernel
    computes x @ W + b."""
    def linear(key, fan_in, fan_out):
        kw, kb = jax.random.split(key)
        bound = 1.0 / jnp.sqrt(fan_in)
        w = jax.random.uniform(kw, (fan_in, fan_out), jnp.float32, -bound, bound)
        b = jax.random.uniform(kb, (1, fan_out), jnp.float32, -bound, bound)
        return w, b

    k1, k2, k3 = jax.random.split(key, 3)
    w1, b1 = linear(k1, input_dim, HIDDEN)
    w2, b2 = linear(k2, HIDDEN, HIDDEN)
    w3, b3 = linear(k3, HIDDEN, output_dim)
    return (w1, b1, w2, b2, w3, b3)


def reference_forward_f32(x, params):
    """Pure-f32 JAX reference (matches the PyTorch module numerics)."""
    w1, b1, w2, b2, w3, b3 = params
    h1 = jnp.maximum(x @ w1 + b1, 0.0)
    h2 = jnp.maximum(h1 @ w2 + b2, 0.0)
    return h2 @ w3 + b3


def reference_forward_bf16(x, params):
    """Reference that mirrors the kernel exactly: bf16 matmul operands,
    f32 accumulation, f32 bias/ReLU."""
    w1, b1, w2, b2, w3, b3 = params
    bf, f32 = jnp.bfloat16, jnp.float32
    h1 = jnp.dot(x.astype(bf), w1.astype(bf), preferred_element_type=f32)
    h1 = jnp.maximum(h1 + b1, 0.0)
    h2 = jnp.dot(h1.astype(bf), w2.astype(bf), preferred_element_type=f32)
    h2 = jnp.maximum(h2 + b2, 0.0)
    out = jnp.dot(h2.astype(bf), w3.astype(bf), preferred_element_type=f32)
    return out + b3


if __name__ == "__main__":
    key = jax.random.PRNGKey(0)
    k_params, k_x1, k_x2 = jax.random.split(key, 3)

    # Atari RAM observations: input_dim = 128 bytes, small action space.
    input_dim, output_dim = 128, 8
    params = init_params(k_params, input_dim, output_dim)
    prepped = prepare_params(params)   # one-time bf16 cast, outside the forward

    # --- case 1: tiny RL-style inference batch (single grid step, unpadded) ---
    x_small = jax.random.uniform(k_x1, (8, input_dim), jnp.float32)
    out_small = jax.block_until_ready(neural_network_forward(x_small, prepped))
    assert out_small.shape == (8, output_dim)
    assert jnp.allclose(out_small, reference_forward_bf16(x_small, params),
                        atol=1e-2, rtol=1e-2), "mismatch vs. bf16 reference (small)"
    assert jnp.allclose(out_small, reference_forward_f32(x_small, params),
                        atol=5e-2, rtol=5e-2), "mismatch vs. f32 reference (small)"

    # --- case 2: non-tile-multiple batch with a small block_b to exercise the
    #             adaptive tile (300 -> 3 steps of 104 rows, 12 padded rows),
    #             multi-step "parallel" grid and the padded-row slice path ---
    x_big = jax.random.uniform(k_x2, (300, input_dim), jnp.float32)
    out_big = jax.block_until_ready(
        neural_network_forward(x_big, prepped, block_b=128))
    assert out_big.shape == (300, output_dim)
    assert jnp.allclose(out_big, reference_forward_bf16(x_big, params),
                        atol=1e-2, rtol=1e-2), "mismatch vs. bf16 reference (big batch)"
    assert jnp.allclose(out_big, reference_forward_f32(x_big, params),
                        atol=5e-2, rtol=5e-2), "mismatch vs. f32 reference (big batch)"

    # --- case 3: default block_b=512 path on the same big batch (single step) ---
    out_big2 = jax.block_until_ready(neural_network_forward(x_big, prepped))
    assert out_big2.shape == (300, output_dim)
    assert jnp.allclose(out_big2, reference_forward_bf16(x_big, params),
                        atol=1e-2, rtol=1e-2), "mismatch vs. bf16 reference (block_b=512)"

    print("KERNEL_OK")
</pallas_src>

<mosaic_0001>
module attributes {stable_mosaic.version = 11 : i64} {
  func.func @_mlp_kernel(%arg0: i32, %arg1: memref<8x128xf32, #tpu.memory_space<vmem>>, %arg2: memref<128x128xbf16, #tpu.memory_space<vmem>>, %arg3: memref<1x128xf32, #tpu.memory_space<vmem>>, %arg4: memref<128x128xbf16, #tpu.memory_space<vmem>>, %arg5: memref<1x128xf32, #tpu.memory_space<vmem>>, %arg6: memref<128x8xbf16, #tpu.memory_space<vmem>>, %arg7: memref<1x8xf32, #tpu.memory_space<vmem>>, %arg8: memref<8x8xf32, #tpu.memory_space<vmem>>) attributes {dimension_semantics = [#tpu.dimension_semantics<parallel>], iteration_bounds = array<i64: 1>, scalar_prefetch = 0 : i64, scratch_operands = 0 : i64, tpu.core_type = #tpu.core_type<tc>, window_params = [{transform_indices = @transform_0, window_bounds = array<i64: 8, 128>}, {pipeline_mode = #tpu.pipeline_mode<synchronous>, transform_indices = @transform_1, window_bounds = array<i64: 128, 128>}, {pipeline_mode = #tpu.pipeline_mode<synchronous>, transform_indices = @transform_2, window_bounds = array<i64: 1, 128>}, {pipeline_mode = #tpu.pipeline_mode<synchronous>, transform_indices = @transform_3, window_bounds = array<i64: 128, 128>}, {pipeline_mode = #tpu.pipeline_mode<synchronous>, transform_indices = @transform_4, window_bounds = array<i64: 1, 128>}, {pipeline_mode = #tpu.pipeline_mode<synchronous>, transform_indices = @transform_5, window_bounds = array<i64: 128, 8>}, {pipeline_mode = #tpu.pipeline_mode<synchronous>, transform_indices = @transform_6, window_bounds = array<i64: 1, 8>}, {transform_indices = @transform_7, window_bounds = array<i64: 8, 8>}]} {
    %c0 = arith.constant 0 : index
    %c0_0 = arith.constant 0 : index
    %0 = vector.load %arg1[%c0, %c0_0] : memref<8x128xf32, #tpu.memory_space<vmem>>, vector<8x128xf32>
    %1 = arith.truncf %0 : vector<8x128xf32> to vector<8x128xbf16>
    %c0_1 = arith.constant 0 : index
    %c0_2 = arith.constant 0 : index
    %2 = vector.load %arg2[%c0_1, %c0_2] : memref<128x128xbf16, #tpu.memory_space<vmem>>, vector<128x128xbf16>
    %cst = arith.constant dense<0.000000e+00> : vector<8x128xf32>
    %3 = tpu.matmul %1, %2, %cst {dimension_numbers = #tpu.dot_dimension_numbers<[1], [0], [0], [1], [0, 0, 1, 1], [], []>} : vector<8x128xbf16>, vector<128x128xbf16>, vector<8x128xf32> -> vector<8x128xf32>
    %c0_3 = arith.constant 0 : index
    %c0_4 = arith.constant 0 : index
    %4 = vector.load %arg3[%c0_3, %c0_4] : memref<1x128xf32, #tpu.memory_space<vmem>>, vector<1x128xf32>
    %5 = vector.broadcast %4 : vector<1x128xf32> to vector<8x128xf32>
    %6 = arith.addf %3, %5 : vector<8x128xf32>
    %cst_5 = arith.constant 0.000000e+00 : f32
    %7 = vector.broadcast %cst_5 : f32 to vector<8x128xf32>
    %8 = arith.maximumf %6, %7 : vector<8x128xf32>
    %9 = arith.truncf %8 : vector<8x128xf32> to vector<8x128xbf16>
    %c0_6 = arith.constant 0 : index
    %c0_7 = arith.constant 0 : index
    %10 = vector.load %arg4[%c0_6, %c0_7] : memref<128x128xbf16, #tpu.memory_space<vmem>>, vector<128x128xbf16>
    %cst_8 = arith.constant dense<0.000000e+00> : vector<8x128xf32>
    %11 = tpu.matmul %9, %10, %cst_8 {dimension_numbers = #tpu.dot_dimension_numbers<[1], [0], [0], [1], [0, 0, 1, 1], [], []>} : vector<8x128xbf16>, vector<128x128xbf16>, vector<8x128xf32> -> vector<8x128xf32>
    %c0_9 = arith.constant 0 : index
    %c0_10 = arith.constant 0 : index
    %12 = vector.load %arg5[%c0_9, %c0_10] : memref<1x128xf32, #tpu.memory_space<vmem>>, vector<1x128xf32>
    %13 = vector.broadcast %12 : vector<1x128xf32> to vector<8x128xf32>
    %14 = arith.addf %11, %13 : vector<8x128xf32>
    %cst_11 = arith.constant 0.000000e+00 : f32
    %15 = vector.broadcast %cst_11 : f32 to vector<8x128xf32>
    %16 = arith.maximumf %14, %15 : vector<8x128xf32>
    %17 = arith.truncf %16 : vector<8x128xf32> to vector<8x128xbf16>
    %c0_12 = arith.constant 0 : index
    %c0_13 = arith.constant 0 : index
    %18 = vector.load %arg6[%c0_12, %c0_13] : memref<128x8xbf16, #tpu.memory_space<vmem>>, vector<128x8xbf16>
    %cst_14 = arith.constant dense<0.000000e+00> : vector<8x8xf32>
    %19 = tpu.matmul %17, %18, %cst_14 {dimension_numbers = #tpu.dot_dimension_numbers<[1], [0], [0], [1], [0, 0, 1, 1], [], []>} : vector<8x128xbf16>, vector<128x8xbf16>, vector<8x8xf32> -> vector<8x8xf32>
    %c0_15 = arith.constant 0 : index
    %c0_16 = arith.constant 0 : index
    %20 = vector.load %arg7[%c0_15, %c0_16] : memref<1x8xf32, #tpu.memory_space<vmem>>, vector<1x8xf32>
    %21 = vector.broadcast %20 : vector<1x8xf32> to vector<8x8xf32>
    %22 = arith.addf %19, %21 : vector<8x8xf32>
    %c0_17 = arith.constant 0 : index
    %c0_18 = arith.constant 0 : index
    %23 = vector.load %arg8[%c0_17, %c0_18] : memref<8x8xf32, #tpu.memory_space<vmem>>, vector<8x8xf32>
    tpu.vector_store %arg8[%c0_17, %c0_18], %22 {strides = array<i32>} : memref<8x8xf32, #tpu.memory_space<vmem>>, vector<8x8xf32>,
    return
  }
  func.func @transform_0(%arg0: i32) -> (i32, i32) {
    %c0_i32 = arith.constant 0 : i32
    %c0_i32_0 = arith.constant 0 : i32
    return %arg0, %c0_i32 : i32, i32
  }
  func.func @transform_1(%arg0: i32) -> (i32, i32) {
    %c0_i32 = arith.constant 0 : i32
    %c0_i32_0 = arith.constant 0 : i32
    %c0_i32_1 = arith.constant 0 : i32
    return %c0_i32, %c0_i32_0 : i32, i32
  }
  func.func @transform_2(%arg0: i32) -> (i32, i32) {
    %c0_i32 = arith.constant 0 : i32
    %c0_i32_0 = arith.constant 0 : i32
    %c0_i32_1 = arith.constant 0 : i32
    return %c0_i32, %c0_i32_0 : i32, i32
  }
  func.func @transform_3(%arg0: i32) -> (i32, i32) {
    %c0_i32 = arith.constant 0 : i32
    %c0_i32_0 = arith.constant 0 : i32
    %c0_i32_1 = arith.constant 0 : i32
    return %c0_i32, %c0_i32_0 : i32, i32
  }
  func.func @transform_4(%arg0: i32) -> (i32, i32) {
    %c0_i32 = arith.constant 0 : i32
    %c0_i32_0 = arith.constant 0 : i32
    %c0_i32_1 = arith.constant 0 : i32
    return %c0_i32, %c0_i32_0 : i32, i32
  }
  func.func @transform_5(%arg0: i32) -> (i32, i32) {
    %c0_i32 = arith.constant 0 : i32
    %c0_i32_0 = arith.constant 0 : i32
    %c0_i32_1 = arith.constant 0 : i32
    return %c0_i32, %c0_i32_0 : i32, i32
  }
  func.func @transform_6(%arg0: i32) -> (i32, i32) {
    %c0_i32 = arith.constant 0 : i32
    %c0_i32_0 = arith.constant 0 : i32
    %c0_i32_1 = arith.constant 0 : i32
    return %c0_i32, %c0_i32_0 : i32, i32
  }
  func.func @transform_7(%arg0: i32) -> (i32, i32) {
    %c0_i32 = arith.constant 0 : i32
    %c0_i32_0 = arith.constant 0 : i32
    return %arg0, %c0_i32 : i32, i32
  }
}

</mosaic_0001>

<llo_original>
// kernel: neural_network_forward.1
$region0: #{neural_network_forward.1}
  #allocation0 [shape = 'u32[]', space=smem, size = 0x4, offset = 0x4, fixed_abs, tag = 'smem constant byte address 0x4 - core index']
  #allocation1 [shape = 'u32[144,128]{1,0:T(1,128)}', space=vmem, size = 0x12000, scoped, tag = 'internal scratch']
  %s0 = inlined_call_operand.hbm [shape: f32[8,128], index: 0, kind: input, shape index: {}]
  %s1 = inlined_call_operand.vmem [shape: bf16[128,128], index: 1, kind: input, shape index: {}]
  %s2 = inlined_call_operand.vmem [shape: f32[1,128], index: 2, kind: input, shape index: {}]
  %s3 = inlined_call_operand.hbm [shape: bf16[128,128], index: 3, kind: input, shape index: {}]
  %s4 = inlined_call_operand.vmem [shape: f32[1,128], index: 4, kind: input, shape index: {}]
  %s5 = inlined_call_operand.vmem [shape: bf16[128,8], index: 5, kind: input, shape index: {}]
  %s6 = inlined_call_operand.vmem [shape: f32[1,8], index: 6, kind: input, shape index: {}]
  %s7 = inlined_call_operand.hbm [shape: f32[8,8], index: 7, kind: output, shape index: {}]
  %s8 = sld [smem:[#allocation0]]
  $region46: #{neural_network_forward.1} parent=0
    _
  %s10 = ssub.s32 1, %s8
  %s11 = scalar_select 0, %s10, %s8
  $region1: #{neural_network_forward.1} parent=0
    #allocation2 [shape = 'u8[4096]{0}', space=vmem, size = 0x1000, scoped, tag = 'input window, operand 0, single buffered']
    #allocation3 [shape = 's32[1]{0}', space=sflag, size = 0x4, scoped, tag = 'scoped memory for neural_network_forward.1']
    #allocation4 [shape = 's32[1]{0}', space=sflag, size = 0x4, scoped, tag = 'scoped memory for neural_network_forward.1']
    #allocation5 [shape = 'u8[32768]{0}', space=vmem, size = 0x8000, scoped, tag = 'input window, operand 3, single buffered']
    #allocation6 [shape = 's32[1]{0}', space=sflag, size = 0x4, scoped, tag = 'scoped memory for neural_network_forward.1']
    #allocation7 [shape = 'u8[4096]{0}', space=vmem, size = 0x1000, scoped, tag = 'output window, operand 0, single buffered']
    %12 = vsyncpa [#allocation3], 0
    %13 = vsyncpa [#allocation6], 0
    %14 = vsyncpa [#allocation4], 0
    // Predicated region
    $region2: #{neural_network_forward.1} parent=1 // pred_check
      _
    $region3: #{neural_network_forward.1} parent=1 // pred_check_branch
      %16 = sbr.rel (0) target = $region5
    $region4: #{neural_network_forward.1} parent=1 // pred_region
      %s18 = ssub.s32 128, 128
      %19 = vsyncadd [#allocation3], %s18
      %s21 = sshll.u32 [#allocation2], 4
      %s22 = int_to_ptr.vmem [resolvable:$true] %s21
      %24 = dma.hbm_to_vmem [thread:$0]  %s0, 128, %s22, [#allocation3]
    $region5: #{neural_network_forward.1} parent=1 // pred_fallthru
      _
    // Predicated region
    $region6: #{neural_network_forward.1} parent=1 // pred_check
      _
    $region7: #{neural_network_forward.1} parent=1 // pred_check_branch
      %26 = sbr.rel (0) target = $region9
    $region8: #{neural_network_forward.1} parent=1 // pred_region
      _
    $region9: #{neural_network_forward.1} parent=1 // pred_fallthru
      _
    // Predicated region
    $region10: #{neural_network_forward.1} parent=1 // pred_check
      _
    $region11: #{neural_network_forward.1} parent=1 // pred_check_branch
      %28 = sbr.rel (0) target = $region13
    $region12: #{neural_network_forward.1} parent=1 // pred_region
      _
    $region13: #{neural_network_forward.1} parent=1 // pred_fallthru
      _
    // Predicated region
    $region14: #{neural_network_forward.1} parent=1 // pred_check
      _
    $region15: #{neural_network_forward.1} parent=1 // pred_check_branch
      %30 = sbr.rel (0) target = $region17
    $region16: #{neural_network_forward.1} parent=1 // pred_region
      %s32 = ssub.s32 1024, 1024
      %33 = vsyncadd [#allocation6], %s32
      %s34 = sshll.u32 [#allocation5], 4
      %s35 = int_to_ptr.vmem [resolvable:$true] %s34
      %40 = dma.hbm_to_vmem [thread:$0]  %s3, 1024, %s35, [#allocation6], 64, 64, 4
    $region17: #{neural_network_forward.1} parent=1 // pred_fallthru
      _
    // Predicated region
    $region18: #{neural_network_forward.1} parent=1 // pred_check
      _
    $region19: #{neural_network_forward.1} parent=1 // pred_check_branch
      %42 = sbr.rel (0) target = $region21
    $region20: #{neural_network_forward.1} parent=1 // pred_region
      _
    $region21: #{neural_network_forward.1} parent=1 // pred_fallthru
      _
    // Predicated region
    $region22: #{neural_network_forward.1} parent=1 // pred_check
      _
    $region23: #{neural_network_forward.1} parent=1 // pred_check_branch
      %44 = sbr.rel (0) target = $region25
    $region24: #{neural_network_forward.1} parent=1 // pred_region
      _
    $region25: #{neural_network_forward.1} parent=1 // pred_fallthru
      _
    // Predicated region
    $region26: #{neural_network_forward.1} parent=1 // pred_check
      _
    $region27: #{neural_network_forward.1} parent=1 // pred_check_branch
      %46 = sbr.rel (0) target = $region29
    $region28: #{neural_network_forward.1} parent=1 // pred_region
      _
    $region29: #{neural_network_forward.1} parent=1 // pred_fallthru
      _
    // Predicated region
    $region30: #{neural_network_forward.1} parent=1 // pred_check
      _
    $region31: #{neural_network_forward.1} parent=1 // pred_check_branch
      %48 = sbr.rel (0) target = $region33
    $region32: #{neural_network_forward.1} parent=1 // pred_region
      %49 = dma.done [#allocation3], 128
    $region33: #{neural_network_forward.1} parent=1 // pred_fallthru
      _
    // Predicated region
    $region34: #{neural_network_forward.1} parent=1 // pred_check
      _
    $region35: #{neural_network_forward.1} parent=1 // pred_check_branch
      %51 = sbr.rel (0) target = $region37
    $region36: #{neural_network_forward.1} parent=1 // pred_region
      %52 = dma.done [#allocation6], 1024
    $region37: #{neural_network_forward.1} parent=1 // pred_fallthru
      _
    %v54 = vld [vmem:[#allocation2] sm:$0xff]
    %v55 = vpack.c.bf16 %v54, %v54
    %v56 = vld [vmem:[%s1] sm:$0xf]
    %v57 = vld [vmem:[%s1 + $0x4] sm:$0xf]
    %v58 = vld [vmem:[%s1 + $0x8] sm:$0xf]
    %v59 = vld [vmem:[%s1 + $0xc] sm:$0xf]
    %v60 = vld [vmem:[%s1 + $0x10] sm:$0xf]
    %v61 = vld [vmem:[%s1 + $0x14] sm:$0xf]
    %v62 = vld [vmem:[%s1 + $0x18] sm:$0xf]
    %v63 = vld [vmem:[%s1 + $0x1c] sm:$0xf]
    %v64 = vld [vmem:[%s1 + $0x20] sm:$0xf]
    %v65 = vld [vmem:[%s1 + $0x24] sm:$0xf]
    %v66 = vld [vmem:[%s1 + $0x28] sm:$0xf]
    %v67 = vld [vmem:[%s1 + $0x2c] sm:$0xf]
    %v68 = vld [vmem:[%s1 + $0x30] sm:$0xf]
    %v69 = vld [vmem:[%s1 + $0x34] sm:$0xf]
    %v70 = vld [vmem:[%s1 + $0x38] sm:$0xf]
    %v71 = vld [vmem:[%s1 + $0x3c] sm:$0xf]
    %v72 = vld [vmem:[%s2] sm:$0x1]
    %v74 = vlaneseq
    %v75 = vshrl.u32 %v74, 7
    %v76 = vsub.s32 0, %v75
    %v77 = vrot.slane %v72, %v76
    %v95 = vunpack.c.l.b16 %v56
    %v96 = vunpack.c.l.b16 %v57
    %v97 = vunpack.c.l.b16 %v58
    %v98 = vunpack.c.l.b16 %v59
    %v99 = vunpack.c.l.b16 %v60
    %v100 = vunpack.c.l.b16 %v61
    %v101 = vunpack.c.l.b16 %v62
    %v102 = vunpack.c.l.b16 %v63
    %v103 = vunpack.c.l.b16 %v64
    %v104 = vunpack.c.l.b16 %v65
    %v105 = vunpack.c.l.b16 %v66
    %v106 = vunpack.c.l.b16 %v67
    %v107 = vunpack.c.l.b16 %v68
    %v108 = vunpack.c.l.b16 %v69
    %v109 = vunpack.c.l.b16 %v70
    %v110 = vunpack.c.l.b16 %v71
    %v111 = vpack.c.b16 %v96, %v95
    %v112 = vpack.c.b16 %v98, %v97
    %v113 = vpack.c.b16 %v100, %v99
    %v114 = vpack.c.b16 %v102, %v101
    %v115 = vpack.c.b16 %v104, %v103
    %v116 = vpack.c.b16 %v106, %v105
    %v117 = vpack.c.b16 %v108, %v107
    %v118 = vpack.c.b16 %v110, %v109
    %127 = vmatprep.subr.bf16.mxu0 0
    %128 = vmatpush1.bf16.msra.mxu0 %v118
    %129 = vmatprep.subr.bf16.mxu0 0
    %130 = vmatpush1.bf16.msra.mxu0 %v117
    %131 = vmatprep.subr.bf16.mxu0 0
    %132 = vmatpush1.bf16.msra.mxu0 %v116
    %133 = vmatprep.subr.bf16.mxu0 0
    %134 = vmatpush1.bf16.msra.mxu0 %v115
    %135 = vmatprep.subr.bf16.mxu0 0
    %136 = vmatpush1.bf16.msra.mxu0 %v114
    %137 = vmatprep.subr.bf16.mxu0 0
    %138 = vmatpush1.bf16.msra.mxu0 %v113
    %139 = vmatprep.subr.bf16.mxu0 0
    %140 = vmatpush1.bf16.msra.mxu0 %v112
    %141 = vmatprep.subr.bf16.mxu0 0
    %142 = vmatpush1.bf16.msra.mxu0 %v111
    %143 = vmatprep.subr.bf16.mxu0 0
    %144 = vmatpush2.bf16.msra.mxu0 0
    %145 = vmatprep.subr.bf16.mxu0 0
    %146 = vmatpush2.bf16.msra.mxu0 0
    %147 = vmatprep.subr.bf16.mxu0 0
    %148 = vmatpush2.bf16.msra.mxu0 0
    %149 = vmatprep.subr.bf16.mxu0 0
    %150 = vmatpush2.bf16.msra.mxu0 0
    %151 = vmatprep.subr.bf16.mxu0 0
    %152 = vmatpush2.bf16.msra.mxu0 0
    %153 = vmatprep.subr.bf16.mxu0 0
    %154 = vmatpush2.bf16.msra.mxu0 0
    %155 = vmatprep.subr.bf16.mxu0 0
    %156 = vmatpush2.bf16.msra.mxu0 0
    %157 = vmatprep.subr.bf16.mxu0 0
    %158 = vmatpush2.bf16.msra.mxu0 0
    %159 = vmatprep.mubr.bf16.mxu0 0
    %160 = vmatmul.mubr.bf16.gmra.mxu0 %v55
    %v161 = vpop.f32.mrf.mxu0
    %v162 = vadd.f32 %v77, %v161
    %v163 = vpop.f32.mrf.mxu0
    %v164 = vpop.f32.mrf.mxu0
    %v165 = vpop.f32.mrf.mxu0
    %166 = vdwg.mxu0
    %v167 = vmax.f32 %v162, 0.0
    %v168 = vpack.c.bf16 %v167, %v167
    %v169 = vld [vmem:[#allocation5] sm:$0xf]
    %v170 = vld [vmem:[#allocation5 + $0x4] sm:$0xf]
    %v171 = vld [vmem:[#allocation5 + $0x8] sm:$0xf]
    %v172 = vld [vmem:[#allocation5 + $0xc] sm:$0xf]
    %v173 = vld [vmem:[#allocation5 + $0x10] sm:$0xf]
    %v174 = vld [vmem:[#allocation5 + $0x14] sm:$0xf]
    %v175 = vld [vmem:[#allocation5 + $0x18] sm:$0xf]
    %v176 = vld [vmem:[#allocation5 + $0x1c] sm:$0xf]
    %v177 = vld [vmem:[#allocation5 + $0x20] sm:$0xf]
    %v178 = vld [vmem:[#allocation5 + $0x24] sm:$0xf]
    %v179 = vld [vmem:[#allocation5 + $0x28] sm:$0xf]
    %v180 = vld [vmem:[#allocation5 + $0x2c] sm:$0xf]
    %v181 = vld [vmem:[#allocation5 + $0x30] sm:$0xf]
    %v182 = vld [vmem:[#allocation5 + $0x34] sm:$0xf]
    %v183 = vld [vmem:[#allocation5 + $0x38] sm:$0xf]
    %v184 = vld [vmem:[#allocation5 + $0x3c] sm:$0xf]
    %v185 = vld [vmem:[%s4] sm:$0x1]
    %v187 = vlaneseq
    %v188 = vshrl.u32 %v187, 7
    %v189 = vsub.s32 0, %v188
    %v190 = vrot.slane %v185, %v189
    %v208 = vunpack.c.l.b16 %v169
    %v209 = vunpack.c.l.b16 %v170
    %v210 = vunpack.c.l.b16 %v171
    %v211 = vunpack.c.l.b16 %v172
    %v212 = vunpack.c.l.b16 %v173
    %v213 = vunpack.c.l.b16 %v174
    %v214 = vunpack.c.l.b16 %v175
    %v215 = vunpack.c.l.b16 %v176
    %v216 = vunpack.c.l.b16 %v177
    %v217 = vunpack.c.l.b16 %v178
    %v218 = vunpack.c.l.b16 %v179
    %v219 = vunpack.c.l.b16 %v180
    %v220 = vunpack.c.l.b16 %v181
    %v221 = vunpack.c.l.b16 %v182
    %v222 = vunpack.c.l.b16 %v183
    %v223 = vunpack.c.l.b16 %v184
    %v224 = vpack.c.b16 %v209, %v208
    %v225 = vpack.c.b16 %v211, %v210
    %v226 = vpack.c.b16 %v213, %v212
    %v227 = vpack.c.b16 %v215, %v214
    %v228 = vpack.c.b16 %v217, %v216
    %v229 = vpack.c.b16 %v219, %v218
    %v230 = vpack.c.b16 %v221, %v220
    %v231 = vpack.c.b16 %v223, %v222
    %240 = vmatprep.subr.bf16.mxu0 0
    %241 = vmatpush1.bf16.msra.mxu0 %v231
    %242 = vmatprep.subr.bf16.mxu0 0
    %243 = vmatpush1.bf16.msra.mxu0 %v230
    %244 = vmatprep.subr.bf16.mxu0 0
    %245 = vmatpush1.bf16.msra.mxu0 %v229
    %246 = vmatprep.subr.bf16.mxu0 0
    %247 = vmatpush1.bf16.msra.mxu0 %v228
    %248 = vmatprep.subr.bf16.mxu0 0
    %249 = vmatpush1.bf16.msra.mxu0 %v227
    %250 = vmatprep.subr.bf16.mxu0 0
    %251 = vmatpush1.bf16.msra.mxu0 %v226
    %252 = vmatprep.subr.bf16.mxu0 0
    %253 = vmatpush1.bf16.msra.mxu0 %v225
    %254 = vmatprep.subr.bf16.mxu0 0
    %255 = vmatpush1.bf16.msra.mxu0 %v224
    %256 = vmatprep.subr.bf16.mxu0 0
    %257 = vmatpush2.bf16.msra.mxu0 0
    %258 = vmatprep.subr.bf16.mxu0 0
    %259 = vmatpush2.bf16.msra.mxu0 0
    %260 = vmatprep.subr.bf16.mxu0 0
    %261 = vmatpush2.bf16.msra.mxu0 0
    %262 = vmatprep.subr.bf16.mxu0 0
    %263 = vmatpush2.bf16.msra.mxu0 0
    %264 = vmatprep.subr.bf16.mxu0 0
    %265 = vmatpush2.bf16.msra.mxu0 0
    %266 = vmatprep.subr.bf16.mxu0 0
    %267 = vmatpush2.bf16.msra.mxu0 0
    %268 = vmatprep.subr.bf16.mxu0 0
    %269 = vmatpush2.bf16.msra.mxu0 0
    %270 = vmatprep.subr.bf16.mxu0 0
    %271 = vmatpush2.bf16.msra.mxu0 0
    %272 = vmatprep.mubr.bf16.mxu0 0
    %273 = vmatmul.mubr.bf16.gmra.mxu0 %v168
    %v274 = vpop.f32.mrf.mxu0
    %v275 = vadd.f32 %v190, %v274
    %v276 = vpop.f32.mrf.mxu0
    %v277 = vpop.f32.mrf.mxu0
    %v278 = vpop.f32.mrf.mxu0
    %279 = vdwg.mxu0
    %v280 = vmax.f32 %v275, 0.0
    %v281 = vpack.c.bf16 %v280, %v280
    %v282 = vld [vmem:[%s5] sm:$0xf]
    %v283 = vld [vmem:[%s5 + $0x4] sm:$0xf]
    %v284 = vld [vmem:[%s5 + $0x8] sm:$0xf]
    %v285 = vld [vmem:[%s5 + $0xc] sm:$0xf]
    %v286 = vld [vmem:[%s5 + $0x10] sm:$0xf]
    %v287 = vld [vmem:[%s5 + $0x14] sm:$0xf]
    %v288 = vld [vmem:[%s5 + $0x18] sm:$0xf]
    %v289 = vld [vmem:[%s5 + $0x1c] sm:$0xf]
    %v290 = vld [vmem:[%s5 + $0x20] sm:$0xf]
    %v291 = vld [vmem:[%s5 + $0x24] sm:$0xf]
    %v292 = vld [vmem:[%s5 + $0x28] sm:$0xf]
    %v293 = vld [vmem:[%s5 + $0x2c] sm:$0xf]
    %v294 = vld [vmem:[%s5 + $0x30] sm:$0xf]
    %v295 = vld [vmem:[%s5 + $0x34] sm:$0xf]
    %v296 = vld [vmem:[%s5 + $0x38] sm:$0xf]
    %v297 = vld [vmem:[%s5 + $0x3c] sm:$0xf]
    %v298 = vld [vmem:[%s6] sm:$0x1]
    %v300 = vlaneseq
    %v301 = vshrl.u32 %v300, 7
    %v302 = vsub.s32 0, %v301
    %v303 = vrot.slane %v298, %v302
    %v321 = vunpack.c.l.b16 %v282
    %v322 = vunpack.c.l.b16 %v283
    %v323 = vunpack.c.l.b16 %v284
    %v324 = vunpack.c.l.b16 %v285
    %v325 = vunpack.c.l.b16 %v286
    %v326 = vunpack.c.l.b16 %v287
    %v327 = vunpack.c.l.b16 %v288
    %v328 = vunpack.c.l.b16 %v289
    %v329 = vunpack.c.l.b16 %v290
    %v330 = vunpack.c.l.b16 %v291
    %v331 = vunpack.c.l.b16 %v292
    %v332 = vunpack.c.l.b16 %v293
    %v333 = vunpack.c.l.b16 %v294
    %v334 = vunpack.c.l.b16 %v295
    %v335 = vunpack.c.l.b16 %v296
    %v336 = vunpack.c.l.b16 %v297
    %v337 = vpack.c.b16 %v322, %v321
    %v338 = vpack.c.b16 %v324, %v323
    %v339 = vpack.c.b16 %v326, %v325
    %v340 = vpack.c.b16 %v328, %v327
    %v341 = vpack.c.b16 %v330, %v329
    %v342 = vpack.c.b16 %v332, %v331
    %v343 = vpack.c.b16 %v334, %v333
    %v344 = vpack.c.b16 %v336, %v335
    %353 = vmatprep.subr.bf16.mxu0 0
    %354 = vmatpush1.bf16.msra.mxu0 %v344
    %355 = vmatprep.subr.bf16.mxu0 0
    %356 = vmatpush1.bf16.msra.mxu0 %v343
    %357 = vmatprep.subr.bf16.mxu0 0
    %358 = vmatpush1.bf16.msra.mxu0 %v342
    %359 = vmatprep.subr.bf16.mxu0 0
    %360 = vmatpush1.bf16.msra.mxu0 %v341
    %361 = vmatprep.subr.bf16.mxu0 0
    %362 = vmatpush1.bf16.msra.mxu0 %v340
    %363 = vmatprep.subr.bf16.mxu0 0
    %364 = vmatpush1.bf16.msra.mxu0 %v339
    %365 = vmatprep.subr.bf16.mxu0 0
    %366 = vmatpush1.bf16.msra.mxu0 %v338
    %367 = vmatprep.subr.bf16.mxu0 0
    %368 = vmatpush1.bf16.msra.mxu0 %v337
    %369 = vmatprep.subr.bf16.mxu0 0
    %370 = vmatpush2.bf16.msra.mxu0 0
    %371 = vmatprep.subr.bf16.mxu0 0
    %372 = vmatpush2.bf16.msra.mxu0 0
    %373 = vmatprep.subr.bf16.mxu0 0
    %374 = vmatpush2.bf16.msra.mxu0 0
    %375 = vmatprep.subr.bf16.mxu0 0
    %376 = vmatpush2.bf16.msra.mxu0 0
    %377 = vmatprep.subr.bf16.mxu0 0
    %378 = vmatpush2.bf16.msra.mxu0 0
    %379 = vmatprep.subr.bf16.mxu0 0
    %380 = vmatpush2.bf16.msra.mxu0 0
    %381 = vmatprep.subr.bf16.mxu0 0
    %382 = vmatpush2.bf16.msra.mxu0 0
    %383 = vmatprep.subr.bf16.mxu0 0
    %384 = vmatpush2.bf16.msra.mxu0 0
    %385 = vmatprep.mubr.bf16.mxu0 0
    %386 = vmatmul.mubr.bf16.gmra.mxu0 %v281
    %v387 = vpop.f32.mrf.mxu0
    %v388 = vadd.f32 %v303, %v387
    %v389 = vpop.f32.mrf.mxu0
    %v390 = vpop.f32.mrf.mxu0
    %v391 = vpop.f32.mrf.mxu0
    %392 = vdwg.mxu0
    %vm393 = vcmask 64512
    %394 = vst.msk [vmem:[#allocation7] sm:$0xff] %vm393, %v388
    // Predicated region
    $region38: #{neural_network_forward.1} parent=1 // pred_check
      _
    $region39: #{neural_network_forward.1} parent=1 // pred_check_branch
      %396 = sbr.rel (0) target = $region41
    $region40: #{neural_network_forward.1} parent=1 // pred_region
      %s398 = ssub.s32 128, 128
      %399 = vsyncadd [#allocation4], %s398
      %s401 = sshll.u32 [#allocation7], 4
      %s402 = int_to_ptr.vmem [resolvable:$true] %s401
      %404 = dma.vmem_to_hbm [thread:$0]  %s402, 128, %s7, [#allocation4]
    $region41: #{neural_network_forward.1} parent=1 // pred_fallthru
      _
    // Predicated region
    $region42: #{neural_network_forward.1} parent=1 // pred_check
      _
    $region43: #{neural_network_forward.1} parent=1 // pred_check_branch
      %406 = sbr.rel (0) target = $region45
    $region44: #{neural_network_forward.1} parent=1 // pred_region
      %407 = dma.done [#allocation4], 128
    $region45: #{neural_network_forward.1} parent=1 // pred_fallthru
      _
    %408 = vsyncpa [#allocation3], 1
    %409 = vsyncpa [#allocation6], 1
    %410 = vsyncpa [#allocation4], 1

</llo_original>
